<compile_context>
chip_gen: v5e
topology: v5e:2x2
jax: 0.10.0
libtpu: 0.0.40
codegen_flags: <defaults>
</compile_context>

<pallas_src>
import jax
import jax.numpy as jnp
from jax.experimental import pallas as pl
from jax.experimental.pallas import tpu as pltpu


def _se_kernel(x_ref, w1t_ref, w2t_ref, o_ref):
    # x_ref block: (B_blk, C, HW), caller dtype.
    # squeeze: per-image, per-channel spatial sum, accumulated in f32.
    # (the 1/HW mean scale is folded into w1t by the wrapper)
    z = jnp.sum(x_ref[...], axis=-1, dtype=jnp.float32)            # (B_blk, C) f32

    # excitation MLP in f32: relu(z @ w1.T) then sigmoid(. @ w2.T),
    # batched over the B_blk images in this block.
    z1 = jnp.maximum(
        jnp.dot(z, w1t_ref[...], preferred_element_type=jnp.float32), 0.0)   # (B_blk, h)
    s = jax.nn.sigmoid(
        jnp.dot(z1, w2t_ref[...], preferred_element_type=jnp.float32))       # (B_blk, C)

    # scale: cast only the gate; re-read the tile from VMEM (fresh load keeps
    # vreg live ranges short for multi-MiB blocks) and broadcast over lanes.
    gate = s.astype(o_ref.dtype)[:, :, None]                        # (B_blk, C, 1)
    o_ref[...] = x_ref[...] * gate


def meta_se_block(x_nchw, w1, w2, *, target_block_bytes=2 * 1024 * 1024):
    """Forward pass of MetaSEBlock (params=None path of the PyTorch module).

    x_nchw: (N, C, H, W) activations (any float dtype; dtype is preserved).
    w1: (C // reduction, C), w2: (C, C // reduction).
    """
    # TODO(synk): the `params` dict override (extract_top_level_dict) is
    # host-side parameter selection; callers pass the chosen w1/w2 here.
    N, C, H, W = x_nchw.shape
    hidden = w1.shape[0]
    HW = H * W

    # Keep the caller's dtype for the big tensor (no f32 upcast pass).
    x_flat = x_nchw.reshape(N, C, HW)
    itemsize = jnp.dtype(x_flat.dtype).itemsize

    # Batch images per block so each tile is ~target_block_bytes (small
    # problems collapse to a single grid step).
    per_image_bytes = C * HW * itemsize
    b_blk = max(1, min(N, target_block_bytes // max(per_image_bytes, 1)))
    grid = (pl.cdiv(N, b_blk),)
    # TODO(synk): if HW is not a multiple of 128, switch the in-kernel layout
    # to (B, HW, C) with C on lanes to keep stores unmasked full-width vst.

    # Resident f32 weights, transposed for column-form batched matmuls;
    # the 1/HW mean scale is folded into w1 (exact: linear in z).
    w1t = (w1.T.astype(jnp.float32) / jnp.float32(HW))   # (C, hidden)
    w2t = w2.T.astype(jnp.float32)                        # (hidden, C)

    cost = pl.CostEstimate(
        flops=2 * N * C * HW + 4 * N * C * hidden,
        transcendentals=N * C,
        bytes_accessed=2 * N * C * HW * itemsize + 2 * C * hidden * 4,
    )

    out_flat = pl.pallas_call(
        _se_kernel,
        out_shape=jax.ShapeDtypeStruct((N, C, HW), x_flat.dtype),
        grid=grid,
        in_specs=[
            pl.BlockSpec((b_blk, C, HW), lambda n: (n, 0, 0)),   # image batch / step
            pl.BlockSpec((C, hidden), lambda n: (0, 0)),         # resident weights
            pl.BlockSpec((hidden, C), lambda n: (0, 0)),
        ],
        out_specs=pl.BlockSpec((b_blk, C, HW), lambda n: (n, 0, 0)),
        compiler_params=pltpu.CompilerParams(
            dimension_semantics=("parallel",)),
        cost_estimate=cost,
    )(x_flat, w1t, w2t)

    return out_flat.reshape(N, C, H, W)


if __name__ == "__main__":
    key = jax.random.PRNGKey(0)
    k0, k1, k2 = jax.random.split(key, 3)

    # Small shapes consistent with the module: batch=2, channels=4, 16x16
    # spatial, reduction=2 -> hidden=2.
    N, C, H, W = 2, 4, 16, 16
    reduction = 2
    hidden = C // reduction

    x = jax.random.normal(k0, (N, C, H, W), jnp.float32)
    # kaiming_normal_-style init: std = sqrt(2 / fan_in)
    w1 = jax.random.normal(k1, (hidden, C), jnp.float32) * (2.0 / C) ** 0.5
    w2 = jax.random.normal(k2, (C, hidden), jnp.float32) * (2.0 / hidden) ** 0.5

    out = meta_se_block(x, w1, w2)
    out = jax.block_until_ready(out)

    # Pure-JAX reference of the same forward.
    z = x.mean(axis=(2, 3))                            # (N, C)
    z1 = jnp.maximum(z @ w1.T, 0.0)                    # (N, hidden)
    s = jax.nn.sigmoid(z1 @ w2.T)                      # (N, C)
    ref = x * s[:, :, None, None]

    err = float(jnp.max(jnp.abs(out - ref)))
    assert jnp.allclose(out, ref, rtol=1e-4, atol=1e-5), err
    print("KERNEL_OK")
</pallas_src>

<mosaic_0001>
module attributes {stable_mosaic.version = 11 : i64} {
  func.func @_se_kernel(%arg0: i32, %arg1: memref<2x4x256xf32, #tpu.memory_space<vmem>>, %arg2: memref<4x2xf32, #tpu.memory_space<vmem>>, %arg3: memref<2x4xf32, #tpu.memory_space<vmem>>, %arg4: memref<2x4x256xf32, #tpu.memory_space<vmem>>) attributes {dimension_semantics = [#tpu.dimension_semantics<parallel>], iteration_bounds = array<i64: 1>, scalar_prefetch = 0 : i64, scratch_operands = 0 : i64, tpu.core_type = #tpu.core_type<tc>, window_params = [{transform_indices = @transform_0, window_bounds = array<i64: 2, 4, 256>}, {pipeline_mode = #tpu.pipeline_mode<synchronous>, transform_indices = @transform_1, window_bounds = array<i64: 4, 2>}, {pipeline_mode = #tpu.pipeline_mode<synchronous>, transform_indices = @transform_2, window_bounds = array<i64: 2, 4>}, {transform_indices = @transform_3, window_bounds = array<i64: 2, 4, 256>}]} {
    %c0 = arith.constant 0 : index
    %c0_0 = arith.constant 0 : index
    %c0_1 = arith.constant 0 : index
    %0 = vector.load %arg1[%c0, %c0_0, %c0_1] : memref<2x4x256xf32, #tpu.memory_space<vmem>>, vector<2x4x256xf32>
    %cst = arith.constant dense<0.000000e+00> : vector<2x4xf32>
    %1 = vector.multi_reduction <add>, %0, %cst [2] : vector<2x4x256xf32> to vector<2x4xf32>
    %c0_2 = arith.constant 0 : index
    %c0_3 = arith.constant 0 : index
    %2 = vector.load %arg2[%c0_2, %c0_3] : memref<4x2xf32, #tpu.memory_space<vmem>>, vector<4x2xf32>
    %cst_4 = arith.constant dense<0.000000e+00> : vector<2x2xf32>
    %3 = tpu.matmul %1, %2, %cst_4 {dimension_numbers = #tpu.dot_dimension_numbers<[1], [0], [0], [1], [0, 0, 1, 1], [], []>} : vector<2x4xf32>, vector<4x2xf32>, vector<2x2xf32> -> vector<2x2xf32>
    %cst_5 = arith.constant 0.000000e+00 : f32
    %4 = vector.broadcast %cst_5 : f32 to vector<2x2xf32>
    %5 = arith.maximumf %3, %4 : vector<2x2xf32>
    %c0_6 = arith.constant 0 : index
    %c0_7 = arith.constant 0 : index
    %6 = vector.load %arg3[%c0_6, %c0_7] : memref<2x4xf32, #tpu.memory_space<vmem>>, vector<2x4xf32>
    %cst_8 = arith.constant dense<0.000000e+00> : vector<2x4xf32>
    %7 = tpu.matmul %5, %6, %cst_8 {dimension_numbers = #tpu.dot_dimension_numbers<[1], [0], [0], [1], [0, 0, 1, 1], [], []>} : vector<2x2xf32>, vector<2x4xf32>, vector<2x4xf32> -> vector<2x4xf32>
    %8 = arith.negf %7 : vector<2x4xf32>
    %9 = math.exp %8 : vector<2x4xf32>
    %cst_9 = arith.constant 1.000000e+00 : f32
    %10 = vector.broadcast %cst_9 : f32 to vector<2x4xf32>
    %11 = arith.addf %10, %9 : vector<2x4xf32>
    %12 = arith.divf %10, %11 : vector<2x4xf32>
    %13 = vector.shape_cast %12 : vector<2x4xf32> to vector<2x4x1xf32>
    %c0_10 = arith.constant 0 : index
    %c0_11 = arith.constant 0 : index
    %c0_12 = arith.constant 0 : index
    %14 = vector.load %arg1[%c0_10, %c0_11, %c0_12] : memref<2x4x256xf32, #tpu.memory_space<vmem>>, vector<2x4x256xf32>
    %15 = vector.broadcast %13 : vector<2x4x1xf32> to vector<2x4x256xf32>
    %16 = arith.mulf %14, %15 : vector<2x4x256xf32>
    %c0_13 = arith.constant 0 : index
    %c0_14 = arith.constant 0 : index
    %c0_15 = arith.constant 0 : index
    %17 = vector.load %arg4[%c0_13, %c0_14, %c0_15] : memref<2x4x256xf32, #tpu.memory_space<vmem>>, vector<2x4x256xf32>
    tpu.vector_store %arg4[%c0_13, %c0_14, %c0_15], %16 {strides = array<i32>} : memref<2x4x256xf32, #tpu.memory_space<vmem>>, vector<2x4x256xf32>,
    return
  }
  func.func @transform_0(%arg0: i32) -> (i32, i32, i32) {
    %c0_i32 = arith.constant 0 : i32
    %c0_i32_0 = arith.constant 0 : i32
    %c0_i32_1 = arith.constant 0 : i32
    return %arg0, %c0_i32, %c0_i32_0 : i32, i32, i32
  }
  func.func @transform_1(%arg0: i32) -> (i32, i32) {
    %c0_i32 = arith.constant 0 : i32
    %c0_i32_0 = arith.constant 0 : i32
    %c0_i32_1 = arith.constant 0 : i32
    return %c0_i32, %c0_i32_0 : i32, i32
  }
  func.func @transform_2(%arg0: i32) -> (i32, i32) {
    %c0_i32 = arith.constant 0 : i32
    %c0_i32_0 = arith.constant 0 : i32
    %c0_i32_1 = arith.constant 0 : i32
    return %c0_i32, %c0_i32_0 : i32, i32
  }
  func.func @transform_3(%arg0: i32) -> (i32, i32, i32) {
    %c0_i32 = arith.constant 0 : i32
    %c0_i32_0 = arith.constant 0 : i32
    %c0_i32_1 = arith.constant 0 : i32
    return %arg0, %c0_i32, %c0_i32_0 : i32, i32, i32
  }
}

</mosaic_0001>

<llo_original>
// kernel: tpu_custom_call.1
$region0: #{tpu_custom_call.1}
  #allocation0 [shape = 'u32[]', space=smem, size = 0x4, offset = 0x4, fixed_abs, tag = 'smem constant byte address 0x4 - core index']
  #allocation1 [shape = 'u32[72,128]{1,0:T(1,128)}', space=vmem, size = 0x9000, scoped, tag = 'internal scratch']
  %s0 = inlined_call_operand.hbm [shape: f32[2,4,256], index: 0, kind: input, shape index: {}]
  %s1 = inlined_call_operand.vmem [shape: f32[4,2], index: 1, kind: input, shape index: {}]
  %s2 = inlined_call_operand.vmem [shape: f32[2,4], index: 2, kind: input, shape index: {}]
  %s3 = inlined_call_operand.hbm [shape: f32[2,4,256], index: 3, kind: output, shape index: {}]
  %s4 = sld [smem:[#allocation0]]
  $region26: #{tpu_custom_call.1} parent=0
    _
  %s6 = ssub.s32 1, %s4
  %s7 = scalar_select 0, %s6, %s4
  $region1: #{tpu_custom_call.1} parent=0
    #allocation2 [shape = 'u8[8192]{0}', space=vmem, size = 0x2000, scoped, tag = 'input window, operand 0, single buffered']
    #allocation3 [shape = 's32[1]{0}', space=sflag, size = 0x4, scoped, tag = 'scoped memory for tpu_custom_call.1']
    #allocation4 [shape = 's32[1]{0}', space=sflag, size = 0x4, scoped, tag = 'scoped memory for tpu_custom_call.1']
    #allocation5 [shape = 'u8[8192]{0}', space=vmem, size = 0x2000, scoped, tag = 'output window, operand 0, single buffered']
    %8 = vsyncpa [#allocation3], 0
    %9 = vsyncpa [#allocation4], 0
    // Predicated region
    $region2: #{tpu_custom_call.1} parent=1 // pred_check
      _
    $region3: #{tpu_custom_call.1} parent=1 // pred_check_branch
      %11 = sbr.rel (0) target = $region5
    $region4: #{tpu_custom_call.1} parent=1 // pred_region
      %13 = vsyncadd [#allocation3], 0
      %s14 = sshll.u32 %s0, 4
      %s15 = int_to_ptr.hbm [resolvable:$true] %s14
      %s16 = sshll.u32 [#allocation2], 4
      %s17 = int_to_ptr.vmem [resolvable:$true] %s16
      %22 = dma.hbm_to_vmem [thread:$0]  %s15, 256, %s17, [#allocation3], 128, 128, 8
    $region5: #{tpu_custom_call.1} parent=1 // pred_fallthru
      _
    // Predicated region
    $region6: #{tpu_custom_call.1} parent=1 // pred_check
      _
    $region7: #{tpu_custom_call.1} parent=1 // pred_check_branch
      %24 = sbr.rel (0) target = $region9
    $region8: #{tpu_custom_call.1} parent=1 // pred_region
      _
    $region9: #{tpu_custom_call.1} parent=1 // pred_fallthru
      _
    // Predicated region
    $region10: #{tpu_custom_call.1} parent=1 // pred_check
      _
    $region11: #{tpu_custom_call.1} parent=1 // pred_check_branch
      %26 = sbr.rel (0) target = $region13
    $region12: #{tpu_custom_call.1} parent=1 // pred_region
      _
    $region13: #{tpu_custom_call.1} parent=1 // pred_fallthru
      _
    // Predicated region
    $region14: #{tpu_custom_call.1} parent=1 // pred_check
      _
    $region15: #{tpu_custom_call.1} parent=1 // pred_check_branch
      %28 = sbr.rel (0) target = $region17
    $region16: #{tpu_custom_call.1} parent=1 // pred_region
      %30 = dma.done [#allocation3], 256
    $region17: #{tpu_custom_call.1} parent=1 // pred_fallthru
      _
    %v31 = vld [vmem:[#allocation2] sm:$0xff]
    %v32 = vld [vmem:[#allocation2 + $0x8] sm:$0xff]
    %35 = vst [vmem:[#allocation1] ss:$2 sm:$0xff] %v31
    %v36 = vld.sshfl [vmem:[#allocation1] sm:$0xff pattern:$0x75316420]
    %v37 = vld.sshfl [vmem:[#allocation1 + $0x8] sm:$0xff pattern:$0x75316420]
    %s38 = scalar_lea.vmem [#allocation1], 16
    %39 = vst [vmem:[%s38] ss:$2 sm:$0xff] %v32
    %v40 = vld.sshfl [vmem:[#allocation1 + $0x10] sm:$0xff pattern:$0x75316420]
    %v41 = vld.sshfl [vmem:[#allocation1 + $0x18] sm:$0xff pattern:$0x75316420]
    %vm46 = vcmask 1043456
    %v47 = vsel %vm46, %v36, 0.0
    %v48 = vsel %vm46, %v37, 0.0
    %v49 = vadd.f32 %v47, %v48
    %50 = vadd.xlane.f32.xlu0 %v49
    %v51 = vpop.xlane.xlu0 %50
    %v52 = vsel %vm46, %v40, 0.0
    %v53 = vsel %vm46, %v41, 0.0
    %v54 = vadd.f32 %v52, %v53
    %55 = vadd.xlane.f32.xlu0 %v54
    %v56 = vpop.xlane.xlu0 %55
    %v57 = vld [vmem:[%s1] sm:$0xf]
    %v60 = vlaneseq
    %v61 = vand.u32 %v60, 127
    %v62 = vperm.slane %v51, %v61
    %v63 = vperm.slane %v56, %v61
    %vm64 = vcmask 1041409
    %v65 = vsel %vm64, %v63, %v62
    %vm66 = vcmask 31744
    %v67 = vsel %vm66, %v65, 0
    %v70 = vsel %vm46, %v57, 0
    %72 = vmatpush.msra.mxu0 0.0
    %73 = vmatpush.msra.mxu0 0.0
    %74 = vmatpush.msra.mxu0 0.0
    %75 = vmatpush.msra.mxu0 0.0
    %76 = vmatpush.msra.mxu0 0.0
    %77 = vmatpush.msra.mxu0 0.0
    %78 = vmatpush.msra.mxu0 0.0
    %79 = vmatpush.msra.mxu0 0.0
    %80 = vmatpush.msra.mxu0 0.0
    %81 = vmatpush.msra.mxu0 0.0
    %82 = vmatpush.msra.mxu0 0.0
    %83 = vmatpush.msra.mxu0 0.0
    %84 = vmatpush.msra.mxu0 0.0
    %85 = vmatpush.msra.mxu0 0.0
    %86 = vmatpush.msra.mxu0 0.0
    %87 = vmatpush.msra.mxu0 %v70
    %88 = vmatmul.f32.gmra.mxu0 %v67
    %v89 = vpop.f32.mrf.mxu0
    %v90 = vadd.f32 0.0, %v89
    %91 = vdwg.mxu0
    %v92 = vmax.f32 %v90, 0.0
    %v93 = vld [vmem:[%s2] sm:$0x3]
    %vm94 = vcmask 15360
    %v96 = vsel %vm94, %v92, 0
    %vm98 = vcmask 1041408
    %v100 = vsel %vm98, %v93, 0
    %102 = vmatpush.msra.mxu0 0.0
    %103 = vmatpush.msra.mxu0 0.0
    %104 = vmatpush.msra.mxu0 0.0
    %105 = vmatpush.msra.mxu0 0.0
    %106 = vmatpush.msra.mxu0 0.0
    %107 = vmatpush.msra.mxu0 0.0
    %108 = vmatpush.msra.mxu0 0.0
    %109 = vmatpush.msra.mxu0 0.0
    %110 = vmatpush.msra.mxu0 0.0
    %111 = vmatpush.msra.mxu0 0.0
    %112 = vmatpush.msra.mxu0 0.0
    %113 = vmatpush.msra.mxu0 0.0
    %114 = vmatpush.msra.mxu0 0.0
    %115 = vmatpush.msra.mxu0 0.0
    %116 = vmatpush.msra.mxu0 0.0
    %117 = vmatpush.msra.mxu0 %v100
    %118 = vmatmul.f32.gmra.mxu0 %v96
    %v119 = vpop.f32.mrf.mxu0
    %v120 = vadd.f32 0.0, %v119
    %121 = vdwg.mxu0
    %v122 = vxor.u32 %v120, 2147483648
    %v123 = vmul.f32 %v122, 1.442695
    %v124 = vpow.pop %v123
    %v125 = vadd.f32 %v124, 1.0
    %v126 = vrcp.pop %v125
    %v127 = vmul.f32 %v125, %v126
    %v128 = vsub.f32 1.0, %v127
    %v129 = vmul.f32 %v126, %v128
    %v130 = vadd.f32 %v126, %v129
    %vm131 = vweird.f32 %v125
    %vm132 = vweird.f32 %v126
    %vm133 = vmor %vm131, %vm132
    %v134 = vsel %vm133, %v126, %v130
    %v135 = vand.u32 2147483647, %v125
    %vm136 = vcmp.eq.f32.partialorder %v135, 8.507059e+37
    %v137 = vand.u32 %v125, 2147483648
    %v138 = vor.u32 1.1754944e-38, %v137
    %v139 = vsel %vm136, %v138, %v134
    %v140 = vmul.f32 1.0, %v139
    %v141 = vperm.slane %v140, 0
    %v142 = vlaneseq
    %v143 = vshrl.u32 %v142, 7
    %145 = vset.pattern.permute.xlu0 %v143
    %146 = vperm.xlu0 %145, %v141
    %v147 = vpop.permute.xlu0 %146
    %v148 = vperm.slane %v140, 1
    %v149 = vlaneseq
    %v150 = vshrl.u32 %v149, 7
    %152 = vset.pattern.permute.xlu0 %v150
    %153 = vperm.xlu0 %152, %v148
    %v154 = vpop.permute.xlu0 %153
    %v158 = vunpack.c.l.s4 839922192
    %v159 = vunpack.c.0.s8 %v158
    %v160 = vperm.slane %v147, %v159
    %v162 = vunpack.c.l.s4 839922192
    %v163 = vunpack.c.0.s8 %v162
    %v164 = vperm.slane %v154, %v163
    %v167 = vmul.f32 %v31, %v160
    %v168 = vmul.f32 %v32, %v164
    %169 = vst [vmem:[#allocation5] sm:$0xff] %v167
    %170 = vst [vmem:[#allocation5 + $0x8] sm:$0xff] %v168
    // Predicated region
    $region18: #{tpu_custom_call.1} parent=1 // pred_check
      _
    $region19: #{tpu_custom_call.1} parent=1 // pred_check_branch
      %172 = sbr.rel (0) target = $region21
    $region20: #{tpu_custom_call.1} parent=1 // pred_region
      %174 = vsyncadd [#allocation4], 0
      %s175 = sshll.u32 [#allocation5], 4
      %s176 = int_to_ptr.vmem [resolvable:$true] %s175
      %s177 = sshll.u32 %s3, 4
      %s178 = int_to_ptr.hbm [resolvable:$true] %s177
      %183 = dma.vmem_to_hbm [thread:$0]  %s176, 256, %s178, [#allocation4], 128, 128, 8
    $region21: #{tpu_custom_call.1} parent=1 // pred_fallthru
      _
    // Predicated region
    $region22: #{tpu_custom_call.1} parent=1 // pred_check
      _
    $region23: #{tpu_custom_call.1} parent=1 // pred_check_branch
      %185 = sbr.rel (0) target = $region25
    $region24: #{tpu_custom_call.1} parent=1 // pred_region
      %187 = dma.done [#allocation4], 256
    $region25: #{tpu_custom_call.1} parent=1 // pred_fallthru
      _
    %188 = vsyncpa [#allocation3], 1
    %189 = vsyncpa [#allocation4], 1

</llo_original>
